<compile_context>
chip_gen: v6e
topology: v6e:2x2x1
jax: 0.10.0
libtpu: 0.0.40
codegen_flags: <defaults>
</compile_context>

<pallas_src>
import functools

import jax
import jax.numpy as jnp
from jax.experimental import pallas as pl
from jax.experimental.pallas import tpu as pltpu

HIDDEN = 750          # logical hidden size: nn.Linear(input_size, 750)
LANE = 128
SUBLANE = 8
MAX_BATCH_TILE = 256  # MXU-height tiles on v6e/v7x; also fine on v5e


def _round_up(x, m):
    return (x + m - 1) // m * m


def _qnet_kernel(x_ref, w1_ref, b1_ref, w2_ref, b2_ref, o_ref):
    # fc1: (TB, D_in) @ (D_in, H_pad), bias + ReLU in f32.
    h = jnp.dot(x_ref[...], w1_ref[...], preferred_element_type=jnp.float32)
    h = jnp.maximum(h + b1_ref[...], 0.0)
    # fc3: (TB, H_pad) @ (H_pad, O_pad); padded rows/cols of w2 are zero.
    out = jnp.dot(h.astype(w2_ref.dtype), w2_ref[...],
                  preferred_element_type=jnp.float32)
    o_ref[...] = (out + b2_ref[...]).astype(o_ref.dtype)


@functools.partial(jax.jit, static_argnames=("d_out", "compute_dtype"))
def nonselfish_qnetwork(x, w1p, b1p, w2p, b2p, *, d_out,
                        compute_dtype=jnp.float32):
    """Forward pass of NonSelfishQNetwork.

    x:   (B, D_in) f32
    w1p: (D_in, H_pad)   zero-padded fc1 weight (transposed vs PyTorch layout)
    b1p: (1, H_pad)      zero-padded fc1 bias
    w2p: (H_pad, O_pad)  zero-padded fc3 weight
    b2p: (1, O_pad)      zero-padded fc3 bias
    Returns (B, d_out) f32 == ReLU(x@W1+b1)@W2+b2 on the logical dims.
    """
    B, d_in = x.shape
    h_pad = w1p.shape[1]
    o_pad = w2p.shape[1]

    # Batch tiling: single sublane-aligned tile when small, 256-row tiles
    # (MXU height) when large.
    if _round_up(B, SUBLANE) <= MAX_BATCH_TILE:
        tb = _round_up(B, SUBLANE)
    else:
        tb = MAX_BATCH_TILE
    b_pad = _round_up(B, tb)

    x_c = x.astype(compute_dtype)
    if b_pad != B:
        x_c = jnp.pad(x_c, ((0, b_pad - B), (0, 0)))
    w1_c = w1p.astype(compute_dtype)
    w2_c = w2p.astype(compute_dtype)

    out_pad = pl.pallas_call(
        _qnet_kernel,
        out_shape=jax.ShapeDtypeStruct((b_pad, o_pad), jnp.float32),
        grid=(b_pad // tb,),
        in_specs=[
            pl.BlockSpec((tb, d_in), lambda i: (i, 0)),      # x: streamed per batch tile
            pl.BlockSpec((d_in, h_pad), lambda i: (0, 0)),   # w1: VMEM-resident
            pl.BlockSpec((1, h_pad), lambda i: (0, 0)),      # b1: VMEM-resident
            pl.BlockSpec((h_pad, o_pad), lambda i: (0, 0)),  # w2: VMEM-resident
            pl.BlockSpec((1, o_pad), lambda i: (0, 0)),      # b2: VMEM-resident
        ],
        out_specs=pl.BlockSpec((tb, o_pad), lambda i: (i, 0)),
        compiler_params=pltpu.CompilerParams(
            dimension_semantics=("parallel",)),
    )(x_c, w1_c, b1p, w2_c, b2p)

    return out_pad[:B, :d_out]


def init_params(key, input_size, output_size, hidden=HIDDEN):
    """Mirror PyTorch init: kaiming_normal_(fan_in, relu) for fc1 weight,
    default nn.Linear uniform(-1/sqrt(fan_in), 1/sqrt(fan_in)) elsewhere.
    Weights are stored as (in_features, out_features)."""
    k1, k2, k3, k4 = jax.random.split(key, 4)
    std1 = jnp.sqrt(2.0 / jnp.float32(input_size))
    lim1 = 1.0 / jnp.sqrt(jnp.float32(input_size))
    lim2 = 1.0 / jnp.sqrt(jnp.float32(hidden))
    w1 = std1 * jax.random.normal(k1, (input_size, hidden), jnp.float32)
    b1 = jax.random.uniform(k2, (1, hidden), jnp.float32, -lim1, lim1)
    w2 = jax.random.uniform(k3, (hidden, output_size), jnp.float32, -lim2, lim2)
    b2 = jax.random.uniform(k4, (1, output_size), jnp.float32, -lim2, lim2)
    return w1, b1, w2, b2


def pad_params(w1, b1, w2, b2):
    """One-time zero-padding of parameters to lane-aligned shapes."""
    d_in, hidden = w1.shape
    d_out = w2.shape[1]
    h_pad = _round_up(hidden, LANE)
    o_pad = _round_up(max(d_out, LANE), LANE)
    w1p = jnp.pad(w1, ((0, 0), (0, h_pad - hidden)))
    b1p = jnp.pad(b1, ((0, 0), (0, h_pad - hidden)))
    w2p = jnp.pad(w2, ((0, h_pad - hidden), (0, o_pad - d_out)))
    b2p = jnp.pad(b2, ((0, 0), (0, o_pad - d_out)))
    return w1p, b1p, w2p, b2p


if __name__ == "__main__":
    input_size, output_size, batch = 32, 8, 2
    key = jax.random.PRNGKey(0)
    kx, kp = jax.random.split(key)
    x = jax.random.normal(kx, (batch, input_size), jnp.float32)

    w1, b1, w2, b2 = init_params(kp, input_size, output_size)
    w1p, b1p, w2p, b2p = pad_params(w1, b1, w2, b2)

    # f32 path (PyTorch-equivalent semantics).
    out = nonselfish_qnetwork(x, w1p, b1p, w2p, b2p, d_out=output_size)
    out = jax.block_until_ready(out)

    ref = jnp.maximum(x @ w1 + b1, 0.0) @ w2 + b2
    assert out.shape == (batch, output_size)
    assert jnp.allclose(out, ref, atol=1e-4, rtol=1e-4)

    # bf16 weights/activations with f32 MXU accumulation (v6e/v7x fast path).
    out_bf16 = jax.block_until_ready(
        nonselfish_qnetwork(x, w1p, b1p, w2p, b2p, d_out=output_size,
                            compute_dtype=jnp.bfloat16))
    assert out_bf16.shape == (batch, output_size)
    assert jnp.allclose(out_bf16, ref, atol=1e-1, rtol=1e-1)

    print("KERNEL_OK")
</pallas_src>

<mosaic_0001>
module attributes {stable_mosaic.version = 11 : i64} {
  func.func @_qnet_kernel(%arg0: i32, %arg1: memref<8x32xf32, #tpu.memory_space<vmem>>, %arg2: memref<32x768xf32, #tpu.memory_space<vmem>>, %arg3: memref<1x768xf32, #tpu.memory_space<vmem>>, %arg4: memref<768x128xf32, #tpu.memory_space<vmem>>, %arg5: memref<1x128xf32, #tpu.memory_space<vmem>>, %arg6: memref<8x128xf32, #tpu.memory_space<vmem>>) attributes {dimension_semantics = [#tpu.dimension_semantics<parallel>], iteration_bounds = array<i64: 1>, scalar_prefetch = 0 : i64, scratch_operands = 0 : i64, tpu.core_type = #tpu.core_type<tc>, window_params = [{transform_indices = @transform_0, window_bounds = array<i64: 8, 32>}, {pipeline_mode = #tpu.pipeline_mode<synchronous>, transform_indices = @transform_1, window_bounds = array<i64: 32, 768>}, {pipeline_mode = #tpu.pipeline_mode<synchronous>, transform_indices = @transform_2, window_bounds = array<i64: 1, 768>}, {pipeline_mode = #tpu.pipeline_mode<synchronous>, transform_indices = @transform_3, window_bounds = array<i64: 768, 128>}, {pipeline_mode = #tpu.pipeline_mode<synchronous>, transform_indices = @transform_4, window_bounds = array<i64: 1, 128>}, {transform_indices = @transform_5, window_bounds = array<i64: 8, 128>}]} {
    %c0 = arith.constant 0 : index
    %c0_0 = arith.constant 0 : index
    %0 = vector.load %arg1[%c0, %c0_0] : memref<8x32xf32, #tpu.memory_space<vmem>>, vector<8x32xf32>
    %c0_1 = arith.constant 0 : index
    %c0_2 = arith.constant 0 : index
    %1 = vector.load %arg2[%c0_1, %c0_2] : memref<32x768xf32, #tpu.memory_space<vmem>>, vector<32x768xf32>
    %cst = arith.constant dense<0.000000e+00> : vector<8x768xf32>
    %2 = tpu.matmul %0, %1, %cst {dimension_numbers = #tpu.dot_dimension_numbers<[1], [0], [0], [1], [0, 0, 1, 1], [], []>} : vector<8x32xf32>, vector<32x768xf32>, vector<8x768xf32> -> vector<8x768xf32>
    %c0_3 = arith.constant 0 : index
    %c0_4 = arith.constant 0 : index
    %3 = vector.load %arg3[%c0_3, %c0_4] : memref<1x768xf32, #tpu.memory_space<vmem>>, vector<1x768xf32>
    %4 = vector.broadcast %3 : vector<1x768xf32> to vector<8x768xf32>
    %5 = arith.addf %2, %4 : vector<8x768xf32>
    %cst_5 = arith.constant 0.000000e+00 : f32
    %6 = vector.broadcast %cst_5 : f32 to vector<8x768xf32>
    %7 = arith.maximumf %5, %6 : vector<8x768xf32>
    %c0_6 = arith.constant 0 : index
    %c0_7 = arith.constant 0 : index
    %8 = vector.load %arg4[%c0_6, %c0_7] : memref<768x128xf32, #tpu.memory_space<vmem>>, vector<768x128xf32>
    %cst_8 = arith.constant dense<0.000000e+00> : vector<8x128xf32>
    %9 = tpu.matmul %7, %8, %cst_8 {dimension_numbers = #tpu.dot_dimension_numbers<[1], [0], [0], [1], [0, 0, 1, 1], [], []>} : vector<8x768xf32>, vector<768x128xf32>, vector<8x128xf32> -> vector<8x128xf32>
    %c0_9 = arith.constant 0 : index
    %c0_10 = arith.constant 0 : index
    %10 = vector.load %arg5[%c0_9, %c0_10] : memref<1x128xf32, #tpu.memory_space<vmem>>, vector<1x128xf32>
    %11 = vector.broadcast %10 : vector<1x128xf32> to vector<8x128xf32>
    %12 = arith.addf %9, %11 : vector<8x128xf32>
    %c0_11 = arith.constant 0 : index
    %c0_12 = arith.constant 0 : index
    %13 = vector.load %arg6[%c0_11, %c0_12] : memref<8x128xf32, #tpu.memory_space<vmem>>, vector<8x128xf32>
    tpu.vector_store %arg6[%c0_11, %c0_12], %12 {strides = array<i32>} : memref<8x128xf32, #tpu.memory_space<vmem>>, vector<8x128xf32>,
    return
  }
  func.func @transform_0(%arg0: i32) -> (i32, i32) {
    %c0_i32 = arith.constant 0 : i32
    %c0_i32_0 = arith.constant 0 : i32
    return %arg0, %c0_i32 : i32, i32
  }
  func.func @transform_1(%arg0: i32) -> (i32, i32) {
    %c0_i32 = arith.constant 0 : i32
    %c0_i32_0 = arith.constant 0 : i32
    %c0_i32_1 = arith.constant 0 : i32
    return %c0_i32, %c0_i32_0 : i32, i32
  }
  func.func @transform_2(%arg0: i32) -> (i32, i32) {
    %c0_i32 = arith.constant 0 : i32
    %c0_i32_0 = arith.constant 0 : i32
    %c0_i32_1 = arith.constant 0 : i32
    return %c0_i32, %c0_i32_0 : i32, i32
  }
  func.func @transform_3(%arg0: i32) -> (i32, i32) {
    %c0_i32 = arith.constant 0 : i32
    %c0_i32_0 = arith.constant 0 : i32
    %c0_i32_1 = arith.constant 0 : i32
    return %c0_i32, %c0_i32_0 : i32, i32
  }
  func.func @transform_4(%arg0: i32) -> (i32, i32) {
    %c0_i32 = arith.constant 0 : i32
    %c0_i32_0 = arith.constant 0 : i32
    %c0_i32_1 = arith.constant 0 : i32
    return %c0_i32, %c0_i32_0 : i32, i32
  }
  func.func @transform_5(%arg0: i32) -> (i32, i32) {
    %c0_i32 = arith.constant 0 : i32
    %c0_i32_0 = arith.constant 0 : i32
    return %arg0, %c0_i32 : i32, i32
  }
}

</mosaic_0001>

<llo_original>
// kernel: nonselfish_qnetwork.1
$region0: #{nonselfish_qnetwork.1}
  #allocation0 [shape = 'u32[]', space=smem, size = 0x4, offset = 0x4, fixed_abs, tag = 'smem constant byte address 0x4 - core index']
  #allocation1 [shape = 'u32[144,128]{1,0:T(1,128)}', space=vmem, size = 0x12000, scoped, tag = 'internal scratch']
  %s0 = inlined_call_operand.vmem [shape: f32[8,32], index: 0, kind: input, shape index: {}]
  %s1 = inlined_call_operand.hbm [shape: f32[32,768], index: 1, kind: input, shape index: {}]
  %s2 = inlined_call_operand.vmem [shape: f32[1,768], index: 2, kind: input, shape index: {}]
  %s3 = inlined_call_operand.hbm [shape: f32[768,128], index: 3, kind: input, shape index: {}]
  %s4 = inlined_call_operand.vmem [shape: f32[1,128], index: 4, kind: input, shape index: {}]
  %s5 = inlined_call_operand.vmem [shape: f32[8,128], index: 5, kind: output, shape index: {}]
  %s6 = sld [smem:[#allocation0]]
  $region38: #{nonselfish_qnetwork.1} parent=0
    _
  %s8 = ssub.s32 1, %s6
  %s9 = scalar_select 0, %s8, %s6
  $region1: #{nonselfish_qnetwork.1} parent=0
    #allocation2 [shape = 'u8[98304]{0}', space=vmem, size = 0x18000, scoped, tag = 'input window, operand 1, single buffered']
    #allocation3 [shape = 's32[1]{0}', space=sflag, size = 0x4, scoped, tag = 'scoped memory for nonselfish_qnetwork.1']
    #allocation4 [shape = 'u8[393216]{0}', space=vmem, size = 0x60000, scoped, tag = 'input window, operand 3, single buffered']
    #allocation5 [shape = 's32[1]{0}', space=sflag, size = 0x4, scoped, tag = 'scoped memory for nonselfish_qnetwork.1']
    %10 = vsyncpa [#allocation3], 0
    %11 = vsyncpa [#allocation5], 0
    // Predicated region
    $region2: #{nonselfish_qnetwork.1} parent=1 // pred_check
      _
    $region3: #{nonselfish_qnetwork.1} parent=1 // pred_check_branch
      %13 = sbr.rel (0) target = $region5
    $region4: #{nonselfish_qnetwork.1} parent=1 // pred_region
      _
    $region5: #{nonselfish_qnetwork.1} parent=1 // pred_fallthru
      _
    // Predicated region
    $region6: #{nonselfish_qnetwork.1} parent=1 // pred_check
      _
    $region7: #{nonselfish_qnetwork.1} parent=1 // pred_check_branch
      %15 = sbr.rel (0) target = $region9
    $region8: #{nonselfish_qnetwork.1} parent=1 // pred_region
      %s17 = ssub.s32 3072, 3072
      %18 = vsyncadd [#allocation3], %s17
      %s19 = sshll.u32 [#allocation2], 4
      %s20 = int_to_ptr.vmem [resolvable:$true] %s19
      %25 = dma.hbm_to_vmem [thread:$0]  %s1, 3072, %s20, [#allocation3], 768, 768, 48
    $region9: #{nonselfish_qnetwork.1} parent=1 // pred_fallthru
      _
    // Predicated region
    $region10: #{nonselfish_qnetwork.1} parent=1 // pred_check
      _
    $region11: #{nonselfish_qnetwork.1} parent=1 // pred_check_branch
      %27 = sbr.rel (0) target = $region13
    $region12: #{nonselfish_qnetwork.1} parent=1 // pred_region
      _
    $region13: #{nonselfish_qnetwork.1} parent=1 // pred_fallthru
      _
    // Predicated region
    $region14: #{nonselfish_qnetwork.1} parent=1 // pred_check
      _
    $region15: #{nonselfish_qnetwork.1} parent=1 // pred_check_branch
      %29 = sbr.rel (0) target = $region17
    $region16: #{nonselfish_qnetwork.1} parent=1 // pred_region
      %s31 = ssub.s32 12288, 12288
      %32 = vsyncadd [#allocation5], %s31
      %s33 = sshll.u32 [#allocation4], 4
      %s34 = int_to_ptr.vmem [resolvable:$true] %s33
      %39 = dma.hbm_to_vmem [thread:$0]  %s3, 12288, %s34, [#allocation5], 128, 128, 8
    $region17: #{nonselfish_qnetwork.1} parent=1 // pred_fallthru
      _
    // Predicated region
    $region18: #{nonselfish_qnetwork.1} parent=1 // pred_check
      _
    $region19: #{nonselfish_qnetwork.1} parent=1 // pred_check_branch
      %41 = sbr.rel (0) target = $region21
    $region20: #{nonselfish_qnetwork.1} parent=1 // pred_region
      _
    $region21: #{nonselfish_qnetwork.1} parent=1 // pred_fallthru
      _
    // Predicated region
    $region22: #{nonselfish_qnetwork.1} parent=1 // pred_check
      _
    $region23: #{nonselfish_qnetwork.1} parent=1 // pred_check_branch
      %43 = sbr.rel (0) target = $region25
    $region24: #{nonselfish_qnetwork.1} parent=1 // pred_region
      %44 = dma.done [#allocation3], 3072
    $region25: #{nonselfish_qnetwork.1} parent=1 // pred_fallthru
      _
    // Predicated region
    $region26: #{nonselfish_qnetwork.1} parent=1 // pred_check
      _
    $region27: #{nonselfish_qnetwork.1} parent=1 // pred_check_branch
      %46 = sbr.rel (0) target = $region29
    $region28: #{nonselfish_qnetwork.1} parent=1 // pred_region
      %47 = dma.done [#allocation5], 12288
    $region29: #{nonselfish_qnetwork.1} parent=1 // pred_fallthru
      _
    %v48 = vld [vmem:[%s0] sm:$0xff]
    %v49 = vld [vmem:[#allocation2] sm:$0xff]
    %v50 = vld [vmem:[#allocation2 + $0x8] sm:$0xff]
    %v51 = vld [vmem:[#allocation2 + $0x10] sm:$0xff]
    %v52 = vld [vmem:[#allocation2 + $0x18] sm:$0xff]
    %v53 = vld [vmem:[#allocation2 + $0x20] sm:$0xff]
    %v54 = vld [vmem:[#allocation2 + $0x28] sm:$0xff]
    %v55 = vld [vmem:[#allocation2 + $0x30] sm:$0xff]
    %v56 = vld [vmem:[#allocation2 + $0x38] sm:$0xff]
    %v57 = vld [vmem:[#allocation2 + $0x40] sm:$0xff]
    %v58 = vld [vmem:[#allocation2 + $0x48] sm:$0xff]
    %v59 = vld [vmem:[#allocation2 + $0x50] sm:$0xff]
    %v60 = vld [vmem:[#allocation2 + $0x58] sm:$0xff]
    %v61 = vld [vmem:[#allocation2 + $0x60] sm:$0xff]
    %v62 = vld [vmem:[#allocation2 + $0x68] sm:$0xff]
    %v63 = vld [vmem:[#allocation2 + $0x70] sm:$0xff]
    %v64 = vld [vmem:[#allocation2 + $0x78] sm:$0xff]
    %v65 = vld [vmem:[#allocation2 + $0x80] sm:$0xff]
    %v66 = vld [vmem:[#allocation2 + $0x88] sm:$0xff]
    %v67 = vld [vmem:[#allocation2 + $0x90] sm:$0xff]
    %v68 = vld [vmem:[#allocation2 + $0x98] sm:$0xff]
    %v69 = vld [vmem:[#allocation2 + $0xa0] sm:$0xff]
    %v70 = vld [vmem:[#allocation2 + $0xa8] sm:$0xff]
    %v71 = vld [vmem:[#allocation2 + $0xb0] sm:$0xff]
    %v72 = vld [vmem:[#allocation2 + $0xb8] sm:$0xff]
    %v73 = vld [vmem:[%s2] sm:$0x3f]
    %v75 = vlaneseq
    %v76 = vshrl.u32 %v75, 7
    %v77 = vsub.s32 0, %v76
    %v78 = vrot.slane %v73, %v77
    %v79 = vlaneseq
    %v80 = vshrl.u32 %v79, 7
    %v81 = vsub.s32 1, %v80
    %v82 = vrot.slane %v73, %v81
    %v83 = vlaneseq
    %v84 = vshrl.u32 %v83, 7
    %v85 = vsub.s32 2, %v84
    %v86 = vrot.slane %v73, %v85
    %v87 = vlaneseq
    %v88 = vshrl.u32 %v87, 7
    %v89 = vsub.s32 3, %v88
    %v90 = vrot.slane %v73, %v89
    %v91 = vlaneseq
    %v92 = vshrl.u32 %v91, 7
    %v93 = vsub.s32 4, %v92
    %v94 = vrot.slane %v73, %v93
    %v95 = vlaneseq
    %v96 = vshrl.u32 %v95, 7
    %v97 = vsub.s32 5, %v96
    %v98 = vrot.slane %v73, %v97
    %vm105 = vcmask 261120
    %v107 = vsel %vm105, %v48, 0
    %109 = vmatprep.subr.mxu0 0.0
    %110 = vmatpush1.msra.mxu0 0.0
    %111 = vmatprep.subr.mxu0 0.0
    %112 = vmatpush1.msra.mxu0 0.0
    %113 = vmatprep.subr.mxu0 0.0
    %114 = vmatpush1.msra.mxu0 0.0
    %115 = vmatprep.subr.mxu0 0.0
    %116 = vmatpush1.msra.mxu0 0.0
    %117 = vmatprep.subr.mxu0 0.0
    %118 = vmatpush1.msra.mxu0 0.0
    %119 = vmatprep.subr.mxu0 0.0
    %120 = vmatpush1.msra.mxu0 0.0
    %121 = vmatprep.subr.mxu0 0.0
    %122 = vmatpush1.msra.mxu0 0.0
    %123 = vmatprep.subr.mxu0 0.0
    %124 = vmatpush1.msra.mxu0 0.0
    %125 = vmatprep.subr.mxu0 0.0
    %126 = vmatpush1.msra.mxu0 0.0
    %127 = vmatprep.subr.mxu0 0.0
    %128 = vmatpush1.msra.mxu0 0.0
    %129 = vmatprep.subr.mxu0 0.0
    %130 = vmatpush1.msra.mxu0 0.0
    %131 = vmatprep.subr.mxu0 0.0
    %132 = vmatpush1.msra.mxu0 0.0
    %133 = vmatprep.subr.mxu0 %v68
    %134 = vmatpush1.msra.mxu0 %v67
    %135 = vmatprep.subr.mxu0 %v62
    %136 = vmatpush1.msra.mxu0 %v61
    %137 = vmatprep.subr.mxu0 %v56
    %138 = vmatpush1.msra.mxu0 %v55
    %139 = vmatprep.subr.mxu0 %v50
    %140 = vmatpush1.msra.mxu0 %v49
    %141 = vmatprep.subr.mxu0 0.0
    %142 = vmatpush2.msra.mxu0 0.0
    %143 = vmatprep.subr.mxu0 0.0
    %144 = vmatpush2.msra.mxu0 0.0
    %145 = vmatprep.subr.mxu0 0.0
    %146 = vmatpush2.msra.mxu0 0.0
    %147 = vmatprep.subr.mxu0 0.0
    %148 = vmatpush2.msra.mxu0 0.0
    %149 = vmatprep.subr.mxu0 0.0
    %150 = vmatpush2.msra.mxu0 0.0
    %151 = vmatprep.subr.mxu0 0.0
    %152 = vmatpush2.msra.mxu0 0.0
    %153 = vmatprep.subr.mxu0 0.0
    %154 = vmatpush2.msra.mxu0 0.0
    %155 = vmatprep.subr.mxu0 0.0
    %156 = vmatpush2.msra.mxu0 0.0
    %157 = vmatprep.subr.mxu0 0.0
    %158 = vmatpush2.msra.mxu0 0.0
    %159 = vmatprep.subr.mxu0 0.0
    %160 = vmatpush2.msra.mxu0 0.0
    %161 = vmatprep.subr.mxu0 0.0
    %162 = vmatpush2.msra.mxu0 0.0
    %163 = vmatprep.subr.mxu0 0.0
    %164 = vmatpush2.msra.mxu0 0.0
    %165 = vmatprep.subr.mxu0 0.0
    %166 = vmatpush2.msra.mxu0 0.0
    %167 = vmatprep.subr.mxu0 0.0
    %168 = vmatpush2.msra.mxu0 0.0
    %169 = vmatprep.subr.mxu0 0.0
    %170 = vmatpush2.msra.mxu0 0.0
    %171 = vmatprep.subr.mxu0 0.0
    %172 = vmatpush2.msra.mxu0 0.0
    %173 = vmatprep.mubr.f32.mxu0 0.0
    %174 = vmatmul.mubr.f32.gmra.mxu0 %v107
    %v175 = vpop.f32.mrf.mxu0
    %v176 = vadd.f32 %v78, %v175
    %v177 = vpop.f32.mrf.mxu0
    %v178 = vadd.f32 %v82, %v177
    %179 = vdwg.mxu0
    %180 = vmatprep.subr.mxu0 0.0
    %181 = vmatpush1.msra.mxu0 0.0
    %182 = vmatprep.subr.mxu0 0.0
    %183 = vmatpush1.msra.mxu0 0.0
    %184 = vmatprep.subr.mxu0 0.0
    %185 = vmatpush1.msra.mxu0 0.0
    %186 = vmatprep.subr.mxu0 0.0
    %187 = vmatpush1.msra.mxu0 0.0
    %188 = vmatprep.subr.mxu0 0.0
    %189 = vmatpush1.msra.mxu0 0.0
    %190 = vmatprep.subr.mxu0 0.0
    %191 = vmatpush1.msra.mxu0 0.0
    %192 = vmatprep.subr.mxu0 0.0
    %193 = vmatpush1.msra.mxu0 0.0
    %194 = vmatprep.subr.mxu0 0.0
    %195 = vmatpush1.msra.mxu0 0.0
    %196 = vmatprep.subr.mxu0 0.0
    %197 = vmatpush1.msra.mxu0 0.0
    %198 = vmatprep.subr.mxu0 0.0
    %199 = vmatpush1.msra.mxu0 0.0
    %200 = vmatprep.subr.mxu0 0.0
    %201 = vmatpush1.msra.mxu0 0.0
    %202 = vmatprep.subr.mxu0 0.0
    %203 = vmatpush1.msra.mxu0 0.0
    %204 = vmatprep.subr.mxu0 %v70
    %205 = vmatpush1.msra.mxu0 %v69
    %206 = vmatprep.subr.mxu0 %v64
    %207 = vmatpush1.msra.mxu0 %v63
    %208 = vmatprep.subr.mxu0 %v58
    %209 = vmatpush1.msra.mxu0 %v57
    %210 = vmatprep.subr.mxu0 %v52
    %211 = vmatpush1.msra.mxu0 %v51
    %212 = vmatprep.subr.mxu0 0.0
    %213 = vmatpush2.msra.mxu0 0.0
    %214 = vmatprep.subr.mxu0 0.0
    %215 = vmatpush2.msra.mxu0 0.0
    %216 = vmatprep.subr.mxu0 0.0
    %217 = vmatpush2.msra.mxu0 0.0
    %218 = vmatprep.subr.mxu0 0.0
    %219 = vmatpush2.msra.mxu0 0.0
    %220 = vmatprep.subr.mxu0 0.0
    %221 = vmatpush2.msra.mxu0 0.0
    %222 = vmatprep.subr.mxu0 0.0
    %223 = vmatpush2.msra.mxu0 0.0
    %224 = vmatprep.subr.mxu0 0.0
    %225 = vmatpush2.msra.mxu0 0.0
    %226 = vmatprep.subr.mxu0 0.0
    %227 = vmatpush2.msra.mxu0 0.0
    %228 = vmatprep.subr.mxu0 0.0
    %229 = vmatpush2.msra.mxu0 0.0
    %230 = vmatprep.subr.mxu0 0.0
    %231 = vmatpush2.msra.mxu0 0.0
    %232 = vmatprep.subr.mxu0 0.0
    %233 = vmatpush2.msra.mxu0 0.0
    %234 = vmatprep.subr.mxu0 0.0
    %235 = vmatpush2.msra.mxu0 0.0
    %236 = vmatprep.subr.mxu0 0.0
    %237 = vmatpush2.msra.mxu0 0.0
    %238 = vmatprep.subr.mxu0 0.0
    %239 = vmatpush2.msra.mxu0 0.0
    %240 = vmatprep.subr.mxu0 0.0
    %241 = vmatpush2.msra.mxu0 0.0
    %242 = vmatprep.subr.mxu0 0.0
    %243 = vmatpush2.msra.mxu0 0.0
    %244 = vmatprep.mubr.f32.mxu0 0.0
    %245 = vmatmul.mubr.f32.gmra.mxu0 %v107
    %v246 = vpop.f32.mrf.mxu0
    %v247 = vadd.f32 %v86, %v246
    %v248 = vpop.f32.mrf.mxu0
    %v249 = vadd.f32 %v90, %v248
    %250 = vdwg.mxu0
    %251 = vmatprep.subr.mxu0 0.0
    %252 = vmatpush1.msra.mxu0 0.0
    %253 = vmatprep.subr.mxu0 0.0
    %254 = vmatpush1.msra.mxu0 0.0
    %255 = vmatprep.subr.mxu0 0.0
    %256 = vmatpush1.msra.mxu0 0.0
    %257 = vmatprep.subr.mxu0 0.0
    %258 = vmatpush1.msra.mxu0 0.0
    %259 = vmatprep.subr.mxu0 0.0
    %260 = vmatpush1.msra.mxu0 0.0
    %261 = vmatprep.subr.mxu0 0.0
    %262 = vmatpush1.msra.mxu0 0.0
    %263 = vmatprep.subr.mxu0 0.0
    %264 = vmatpush1.msra.mxu0 0.0
    %265 = vmatprep.subr.mxu0 0.0
    %266 = vmatpush1.msra.mxu0 0.0
    %267 = vmatprep.subr.mxu0 0.0
    %268 = vmatpush1.msra.mxu0 0.0
    %269 = vmatprep.subr.mxu0 0.0
    %270 = vmatpush1.msra.mxu0 0.0
    %271 = vmatprep.subr.mxu0 0.0
    %272 = vmatpush1.msra.mxu0 0.0
    %273 = vmatprep.subr.mxu0 0.0
    %274 = vmatpush1.msra.mxu0 0.0
    %275 = vmatprep.subr.mxu0 %v72
    %276 = vmatpush1.msra.mxu0 %v71
    %277 = vmatprep.subr.mxu0 %v66
    %278 = vmatpush1.msra.mxu0 %v65
    %279 = vmatprep.subr.mxu0 %v60
    %280 = vmatpush1.msra.mxu0 %v59
    %281 = vmatprep.subr.mxu0 %v54
    %282 = vmatpush1.msra.mxu0 %v53
    %283 = vmatprep.subr.mxu0 0.0
    %284 = vmatpush2.msra.mxu0 0.0
    %285 = vmatprep.subr.mxu0 0.0
    %286 = vmatpush2.msra.mxu0 0.0
    %287 = vmatprep.subr.mxu0 0.0
    %288 = vmatpush2.msra.mxu0 0.0
    %289 = vmatprep.subr.mxu0 0.0
    %290 = vmatpush2.msra.mxu0 0.0
    %291 = vmatprep.subr.mxu0 0.0
    %292 = vmatpush2.msra.mxu0 0.0
    %293 = vmatprep.subr.mxu0 0.0
    %294 = vmatpush2.msra.mxu0 0.0
    %295 = vmatprep.subr.mxu0 0.0
    %296 = vmatpush2.msra.mxu0 0.0
    %297 = vmatprep.subr.mxu0 0.0
    %298 = vmatpush2.msra.mxu0 0.0
    %299 = vmatprep.subr.mxu0 0.0
    %300 = vmatpush2.msra.mxu0 0.0
    %301 = vmatprep.subr.mxu0 0.0
    %302 = vmatpush2.msra.mxu0 0.0
    %303 = vmatprep.subr.mxu0 0.0
    %304 = vmatpush2.msra.mxu0 0.0
    %305 = vmatprep.subr.mxu0 0.0
    %306 = vmatpush2.msra.mxu0 0.0
    %307 = vmatprep.subr.mxu0 0.0
    %308 = vmatpush2.msra.mxu0 0.0
    %309 = vmatprep.subr.mxu0 0.0
    %310 = vmatpush2.msra.mxu0 0.0
    %311 = vmatprep.subr.mxu0 0.0
    %312 = vmatpush2.msra.mxu0 0.0
    %313 = vmatprep.subr.mxu0 0.0
    %314 = vmatpush2.msra.mxu0 0.0
    %315 = vmatprep.mubr.f32.mxu0 0.0
    %316 = vmatmul.mubr.f32.gmra.mxu0 %v107
    %v317 = vpop.f32.mrf.mxu0
    %v318 = vadd.f32 %v94, %v317
    %v319 = vpop.f32.mrf.mxu0
    %v320 = vadd.f32 %v98, %v319
    %321 = vdwg.mxu0
    %v322 = vmax.f32 %v176, 0.0
    %v323 = vmax.f32 %v178, 0.0
    %v324 = vmax.f32 %v247, 0.0
    %v325 = vmax.f32 %v249, 0.0
    %v326 = vmax.f32 %v318, 0.0
    %v327 = vmax.f32 %v320, 0.0
    %v328 = vld [vmem:[#allocation4] sm:$0xff]
    %v329 = vld [vmem:[#allocation4 + $0x8] sm:$0xff]
    %v330 = vld [vmem:[#allocation4 + $0x10] sm:$0xff]
    %v331 = vld [vmem:[#allocation4 + $0x18] sm:$0xff]
    %v332 = vld [vmem:[#allocation4 + $0x20] sm:$0xff]
    %v333 = vld [vmem:[#allocation4 + $0x28] sm:$0xff]
    %v334 = vld [vmem:[#allocation4 + $0x30] sm:$0xff]
    %v335 = vld [vmem:[#allocation4 + $0x38] sm:$0xff]
    %v336 = vld [vmem:[#allocation4 + $0x40] sm:$0xff]
    %v337 = vld [vmem:[#allocation4 + $0x48] sm:$0xff]
    %v338 = vld [vmem:[#allocation4 + $0x50] sm:$0xff]
    %v339 = vld [vmem:[#allocation4 + $0x58] sm:$0xff]
    %v340 = vld [vmem:[#allocation4 + $0x60] sm:$0xff]
    %v341 = vld [vmem:[#allocation4 + $0x68] sm:$0xff]
    %v342 = vld [vmem:[#allocation4 + $0x70] sm:$0xff]
    %v343 = vld [vmem:[#allocation4 + $0x78] sm:$0xff]
    %v344 = vld [vmem:[#allocation4 + $0x80] sm:$0xff]
    %v345 = vld [vmem:[#allocation4 + $0x88] sm:$0xff]
    %v346 = vld [vmem:[#allocation4 + $0x90] sm:$0xff]
    %v347 = vld [vmem:[#allocation4 + $0x98] sm:$0xff]
    %v348 = vld [vmem:[#allocation4 + $0xa0] sm:$0xff]
    %v349 = vld [vmem:[#allocation4 + $0xa8] sm:$0xff]
    %v350 = vld [vmem:[#allocation4 + $0xb0] sm:$0xff]
    %v351 = vld [vmem:[#allocation4 + $0xb8] sm:$0xff]
    %v352 = vld [vmem:[#allocation4 + $0xc0] sm:$0xff]
    %v353 = vld [vmem:[#allocation4 + $0xc8] sm:$0xff]
    %v354 = vld [vmem:[#allocation4 + $0xd0] sm:$0xff]
    %v355 = vld [vmem:[#allocation4 + $0xd8] sm:$0xff]
    %v356 = vld [vmem:[#allocation4 + $0xe0] sm:$0xff]
    %v357 = vld [vmem:[#allocation4 + $0xe8] sm:$0xff]
    %v358 = vld [vmem:[#allocation4 + $0xf0] sm:$0xff]
    %v359 = vld [vmem:[#allocation4 + $0xf8] sm:$0xff]
    %v360 = vld [vmem:[#allocation4 + $0x100] sm:$0xff]
    %v361 = vld [vmem:[#allocation4 + $0x108] sm:$0xff]
    %v362 = vld [vmem:[#allocation4 + $0x110] sm:$0xff]
    %v363 = vld [vmem:[#allocation4 + $0x118] sm:$0xff]
    %v364 = vld [vmem:[#allocation4 + $0x120] sm:$0xff]
    %v365 = vld [vmem:[#allocation4 + $0x128] sm:$0xff]
    %v366 = vld [vmem:[#allocation4 + $0x130] sm:$0xff]
    %v367 = vld [vmem:[#allocation4 + $0x138] sm:$0xff]
    %v368 = vld [vmem:[#allocation4 + $0x140] sm:$0xff]
    %v369 = vld [vmem:[#allocation4 + $0x148] sm:$0xff]
    %v370 = vld [vmem:[#allocation4 + $0x150] sm:$0xff]
    %v371 = vld [vmem:[#allocation4 + $0x158] sm:$0xff]
    %v372 = vld [vmem:[#allocation4 + $0x160] sm:$0xff]
    %v373 = vld [vmem:[#allocation4 + $0x168] sm:$0xff]
    %v374 = vld [vmem:[#allocation4 + $0x170] sm:$0xff]
    %v375 = vld [vmem:[#allocation4 + $0x178] sm:$0xff]
    %v376 = vld [vmem:[#allocation4 + $0x180] sm:$0xff]
    %v377 = vld [vmem:[#allocation4 + $0x188] sm:$0xff]
    %v378 = vld [vmem:[#allocation4 + $0x190] sm:$0xff]
    %v379 = vld [vmem:[#allocation4 + $0x198] sm:$0xff]
    %v380 = vld [vmem:[#allocation4 + $0x1a0] sm:$0xff]
    %v381 = vld [vmem:[#allocation4 + $0x1a8] sm:$0xff]
    %v382 = vld [vmem:[#allocation4 + $0x1b0] sm:$0xff]
    %v383 = vld [vmem:[#allocation4 + $0x1b8] sm:$0xff]
    %v384 = vld [vmem:[#allocation4 + $0x1c0] sm:$0xff]
    %v385 = vld [vmem:[#allocation4 + $0x1c8] sm:$0xff]
    %v386 = vld [vmem:[#allocation4 + $0x1d0] sm:$0xff]
    %v387 = vld [vmem:[#allocation4 + $0x1d8] sm:$0xff]
    %v388 = vld [vmem:[#allocation4 + $0x1e0] sm:$0xff]
    %v389 = vld [vmem:[#allocation4 + $0x1e8] sm:$0xff]
    %v390 = vld [vmem:[#allocation4 + $0x1f0] sm:$0xff]
    %v391 = vld [vmem:[#allocation4 + $0x1f8] sm:$0xff]
    %v392 = vld [vmem:[#allocation4 + $0x200] sm:$0xff]
    %v393 = vld [vmem:[#allocation4 + $0x208] sm:$0xff]
    %v394 = vld [vmem:[#allocation4 + $0x210] sm:$0xff]
    %v395 = vld [vmem:[#allocation4 + $0x218] sm:$0xff]
    %v396 = vld [vmem:[#allocation4 + $0x220] sm:$0xff]
    %v397 = vld [vmem:[#allocation4 + $0x228] sm:$0xff]
    %v398 = vld [vmem:[#allocation4 + $0x230] sm:$0xff]
    %v399 = vld [vmem:[#allocation4 + $0x238] sm:$0xff]
    %v400 = vld [vmem:[#allocation4 + $0x240] sm:$0xff]
    %v401 = vld [vmem:[#allocation4 + $0x248] sm:$0xff]
    %v402 = vld [vmem:[#allocation4 + $0x250] sm:$0xff]
    %v403 = vld [vmem:[#allocation4 + $0x258] sm:$0xff]
    %v404 = vld [vmem:[#allocation4 + $0x260] sm:$0xff]
    %v405 = vld [vmem:[#allocation4 + $0x268] sm:$0xff]
    %v406 = vld [vmem:[#allocation4 + $0x270] sm:$0xff]
    %v407 = vld [vmem:[#allocation4 + $0x278] sm:$0xff]
    %v408 = vld [vmem:[#allocation4 + $0x280] sm:$0xff]
    %v409 = vld [vmem:[#allocation4 + $0x288] sm:$0xff]
    %v410 = vld [vmem:[#allocation4 + $0x290] sm:$0xff]
    %v411 = vld [vmem:[#allocation4 + $0x298] sm:$0xff]
    %v412 = vld [vmem:[#allocation4 + $0x2a0] sm:$0xff]
    %v413 = vld [vmem:[#allocation4 + $0x2a8] sm:$0xff]
    %v414 = vld [vmem:[#allocation4 + $0x2b0] sm:$0xff]
    %v415 = vld [vmem:[#allocation4 + $0x2b8] sm:$0xff]
    %v416 = vld [vmem:[#allocation4 + $0x2c0] sm:$0xff]
    %v417 = vld [vmem:[#allocation4 + $0x2c8] sm:$0xff]
    %v418 = vld [vmem:[#allocation4 + $0x2d0] sm:$0xff]
    %v419 = vld [vmem:[#allocation4 + $0x2d8] sm:$0xff]
    %v420 = vld [vmem:[#allocation4 + $0x2e0] sm:$0xff]
    %v421 = vld [vmem:[#allocation4 + $0x2e8] sm:$0xff]
    %v422 = vld [vmem:[#allocation4 + $0x2f0] sm:$0xff]
    %v423 = vld [vmem:[#allocation4 + $0x2f8] sm:$0xff]
    %v424 = vld [vmem:[%s4] sm:$0x1]
    %v426 = vlaneseq
    %v427 = vshrl.u32 %v426, 7
    %v428 = vsub.s32 0, %v427
    %v429 = vrot.slane %v424, %v428
    %431 = vmatprep.subr.mxu0 0.0
    %432 = vmatpush1.msra.mxu0 %v343
    %433 = vmatprep.subr.mxu0 0.0
    %434 = vmatpush1.msra.mxu0 %v342
    %435 = vmatprep.subr.mxu0 0.0
    %436 = vmatpush1.msra.mxu0 %v341
    %437 = vmatprep.subr.mxu0 0.0
    %438 = vmatpush1.msra.mxu0 %v340
    %439 = vmatprep.subr.mxu0 0.0
    %440 = vmatpush1.msra.mxu0 %v339
    %441 = vmatprep.subr.mxu0 0.0
    %442 = vmatpush1.msra.mxu0 %v338
    %443 = vmatprep.subr.mxu0 0.0
    %444 = vmatpush1.msra.mxu0 %v337
    %445 = vmatprep.subr.mxu0 0.0
    %446 = vmatpush1.msra.mxu0 %v336
    %447 = vmatprep.subr.mxu0 0.0
    %448 = vmatpush1.msra.mxu0 %v335
    %449 = vmatprep.subr.mxu0 0.0
    %450 = vmatpush1.msra.mxu0 %v334
    %451 = vmatprep.subr.mxu0 0.0
    %452 = vmatpush1.msra.mxu0 %v333
    %453 = vmatprep.subr.mxu0 0.0
    %454 = vmatpush1.msra.mxu0 %v332
    %455 = vmatprep.subr.mxu0 0.0
    %456 = vmatpush1.msra.mxu0 %v331
    %457 = vmatprep.subr.mxu0 0.0
    %458 = vmatpush1.msra.mxu0 %v330
    %459 = vmatprep.subr.mxu0 0.0
    %460 = vmatpush1.msra.mxu0 %v329
    %461 = vmatprep.subr.mxu0 0.0
    %462 = vmatpush1.msra.mxu0 %v328
    %463 = vmatprep.subr.mxu0 0.0
    %464 = vmatpush2.msra.mxu0 %v359
    %465 = vmatprep.subr.mxu0 0.0
    %466 = vmatpush2.msra.mxu0 %v358
    %467 = vmatprep.subr.mxu0 0.0
    %468 = vmatpush2.msra.mxu0 %v357
    %469 = vmatprep.subr.mxu0 0.0
    %470 = vmatpush2.msra.mxu0 %v356
    %471 = vmatprep.subr.mxu0 0.0
    %472 = vmatpush2.msra.mxu0 %v355
    %473 = vmatprep.subr.mxu0 0.0
    %474 = vmatpush2.msra.mxu0 %v354
    %475 = vmatprep.subr.mxu0 0.0
    %476 = vmatpush2.msra.mxu0 %v353
    %477 = vmatprep.subr.mxu0 0.0
    %478 = vmatpush2.msra.mxu0 %v352
    %479 = vmatprep.subr.mxu0 0.0
    %480 = vmatpush2.msra.mxu0 %v351
    %481 = vmatprep.subr.mxu0 0.0
    %482 = vmatpush2.msra.mxu0 %v350
    %483 = vmatprep.subr.mxu0 0.0
    %484 = vmatpush2.msra.mxu0 %v349
    %485 = vmatprep.subr.mxu0 0.0
    %486 = vmatpush2.msra.mxu0 %v348
    %487 = vmatprep.subr.mxu0 0.0
    %488 = vmatpush2.msra.mxu0 %v347
    %489 = vmatprep.subr.mxu0 0.0
    %490 = vmatpush2.msra.mxu0 %v346
    %491 = vmatprep.subr.mxu0 0.0
    %492 = vmatpush2.msra.mxu0 %v345
    %493 = vmatprep.subr.mxu0 0.0
    %494 = vmatpush2.msra.mxu0 %v344
    %495 = vmatprep.mubr.f32.mxu0 %v323
    %496 = vmatmul.mubr.f32.gmra.mxu0 %v322
    %v497 = vpop.f32.mrf.mxu0
    %v498 = vadd.f32 %v429, %v497
    %v499 = vpop.f32.mrf.mxu0
    %500 = vdwg.mxu0
    %501 = vmatprep.subr.mxu0 0.0
    %502 = vmatpush1.msra.mxu0 %v375
    %503 = vmatprep.subr.mxu0 0.0
    %504 = vmatpush1.msra.mxu0 %v374
    %505 = vmatprep.subr.mxu0 0.0
    %506 = vmatpush1.msra.mxu0 %v373
    %507 = vmatprep.subr.mxu0 0.0
    %508 = vmatpush1.msra.mxu0 %v372
    %509 = vmatprep.subr.mxu0 0.0
    %510 = vmatpush1.msra.mxu0 %v371
    %511 = vmatprep.subr.mxu0 0.0
    %512 = vmatpush1.msra.mxu0 %v370
    %513 = vmatprep.subr.mxu0 0.0
    %514 = vmatpush1.msra.mxu0 %v369
    %515 = vmatprep.subr.mxu0 0.0
    %516 = vmatpush1.msra.mxu0 %v368
    %517 = vmatprep.subr.mxu0 0.0
    %518 = vmatpush1.msra.mxu0 %v367
    %519 = vmatprep.subr.mxu0 0.0
    %520 = vmatpush1.msra.mxu0 %v366
    %521 = vmatprep.subr.mxu0 0.0
    %522 = vmatpush1.msra.mxu0 %v365
    %523 = vmatprep.subr.mxu0 0.0
    %524 = vmatpush1.msra.mxu0 %v364
    %525 = vmatprep.subr.mxu0 0.0
    %526 = vmatpush1.msra.mxu0 %v363
    %527 = vmatprep.subr.mxu0 0.0
    %528 = vmatpush1.msra.mxu0 %v362
    %529 = vmatprep.subr.mxu0 0.0
    %530 = vmatpush1.msra.mxu0 %v361
    %531 = vmatprep.subr.mxu0 0.0
    %532 = vmatpush1.msra.mxu0 %v360
    %533 = vmatprep.subr.mxu0 0.0
    %534 = vmatpush2.msra.mxu0 %v391
    %535 = vmatprep.subr.mxu0 0.0
    %536 = vmatpush2.msra.mxu0 %v390
    %537 = vmatprep.subr.mxu0 0.0
    %538 = vmatpush2.msra.mxu0 %v389
    %539 = vmatprep.subr.mxu0 0.0
    %540 = vmatpush2.msra.mxu0 %v388
    %541 = vmatprep.subr.mxu0 0.0
    %542 = vmatpush2.msra.mxu0 %v387
    %543 = vmatprep.subr.mxu0 0.0
    %544 = vmatpush2.msra.mxu0 %v386
    %545 = vmatprep.subr.mxu0 0.0
    %546 = vmatpush2.msra.mxu0 %v385
    %547 = vmatprep.subr.mxu0 0.0
    %548 = vmatpush2.msra.mxu0 %v384
    %549 = vmatprep.subr.mxu0 0.0
    %550 = vmatpush2.msra.mxu0 %v383
    %551 = vmatprep.subr.mxu0 0.0
    %552 = vmatpush2.msra.mxu0 %v382
    %553 = vmatprep.subr.mxu0 0.0
    %554 = vmatpush2.msra.mxu0 %v381
    %555 = vmatprep.subr.mxu0 0.0
    %556 = vmatpush2.msra.mxu0 %v380
    %557 = vmatprep.subr.mxu0 0.0
    %558 = vmatpush2.msra.mxu0 %v379
    %559 = vmatprep.subr.mxu0 0.0
    %560 = vmatpush2.msra.mxu0 %v378
    %561 = vmatprep.subr.mxu0 0.0
    %562 = vmatpush2.msra.mxu0 %v377
    %563 = vmatprep.subr.mxu0 0.0
    %564 = vmatpush2.msra.mxu0 %v376
    %565 = vmatprep.mubr.f32.mxu0 %v325
    %566 = vmatmul.mubr.f32.gmra.mxu0 %v324
    %v567 = vpop.f32.mrf.mxu0
    %v568 = vadd.f32 %v498, %v567
    %v569 = vpop.f32.mrf.mxu0
    %570 = vdwg.mxu0
    %571 = vmatprep.subr.mxu0 0.0
    %572 = vmatpush1.msra.mxu0 %v407
    %573 = vmatprep.subr.mxu0 0.0
    %574 = vmatpush1.msra.mxu0 %v406
    %575 = vmatprep.subr.mxu0 0.0
    %576 = vmatpush1.msra.mxu0 %v405
    %577 = vmatprep.subr.mxu0 0.0
    %578 = vmatpush1.msra.mxu0 %v404
    %579 = vmatprep.subr.mxu0 0.0
    %580 = vmatpush1.msra.mxu0 %v403
    %581 = vmatprep.subr.mxu0 0.0
    %582 = vmatpush1.msra.mxu0 %v402
    %583 = vmatprep.subr.mxu0 0.0
    %584 = vmatpush1.msra.mxu0 %v401
    %585 = vmatprep.subr.mxu0 0.0
    %586 = vmatpush1.msra.mxu0 %v400
    %587 = vmatprep.subr.mxu0 0.0
    %588 = vmatpush1.msra.mxu0 %v399
    %589 = vmatprep.subr.mxu0 0.0
    %590 = vmatpush1.msra.mxu0 %v398
    %591 = vmatprep.subr.mxu0 0.0
    %592 = vmatpush1.msra.mxu0 %v397
    %593 = vmatprep.subr.mxu0 0.0
    %594 = vmatpush1.msra.mxu0 %v396
    %595 = vmatprep.subr.mxu0 0.0
    %596 = vmatpush1.msra.mxu0 %v395
    %597 = vmatprep.subr.mxu0 0.0
    %598 = vmatpush1.msra.mxu0 %v394
    %599 = vmatprep.subr.mxu0 0.0
    %600 = vmatpush1.msra.mxu0 %v393
    %601 = vmatprep.subr.mxu0 0.0
    %602 = vmatpush1.msra.mxu0 %v392
    %603 = vmatprep.subr.mxu0 0.0
    %604 = vmatpush2.msra.mxu0 %v423
    %605 = vmatprep.subr.mxu0 0.0
    %606 = vmatpush2.msra.mxu0 %v422
    %607 = vmatprep.subr.mxu0 0.0
    %608 = vmatpush2.msra.mxu0 %v421
    %609 = vmatprep.subr.mxu0 0.0
    %610 = vmatpush2.msra.mxu0 %v420
    %611 = vmatprep.subr.mxu0 0.0
    %612 = vmatpush2.msra.mxu0 %v419
    %613 = vmatprep.subr.mxu0 0.0
    %614 = vmatpush2.msra.mxu0 %v418
    %615 = vmatprep.subr.mxu0 0.0
    %616 = vmatpush2.msra.mxu0 %v417
    %617 = vmatprep.subr.mxu0 0.0
    %618 = vmatpush2.msra.mxu0 %v416
    %619 = vmatprep.subr.mxu0 0.0
    %620 = vmatpush2.msra.mxu0 %v415
    %621 = vmatprep.subr.mxu0 0.0
    %622 = vmatpush2.msra.mxu0 %v414
    %623 = vmatprep.subr.mxu0 0.0
    %624 = vmatpush2.msra.mxu0 %v413
    %625 = vmatprep.subr.mxu0 0.0
    %626 = vmatpush2.msra.mxu0 %v412
    %627 = vmatprep.subr.mxu0 0.0
    %628 = vmatpush2.msra.mxu0 %v411
    %629 = vmatprep.subr.mxu0 0.0
    %630 = vmatpush2.msra.mxu0 %v410
    %631 = vmatprep.subr.mxu0 0.0
    %632 = vmatpush2.msra.mxu0 %v409
    %633 = vmatprep.subr.mxu0 0.0
    %634 = vmatpush2.msra.mxu0 %v408
    %635 = vmatprep.mubr.f32.mxu0 %v327
    %636 = vmatmul.mubr.f32.gmra.mxu0 %v326
    %v637 = vpop.f32.mrf.mxu0
    %v638 = vadd.f32 %v568, %v637
    %v639 = vpop.f32.mrf.mxu0
    %640 = vdwg.mxu0
    %641 = vst [vmem:[%s5] sm:$0xff] %v638
    // Predicated region
    $region30: #{nonselfish_qnetwork.1} parent=1 // pred_check
      _
    $region31: #{nonselfish_qnetwork.1} parent=1 // pred_check_branch
      %643 = sbr.rel (0) target = $region33
    $region32: #{nonselfish_qnetwork.1} parent=1 // pred_region
      _
    $region33: #{nonselfish_qnetwork.1} parent=1 // pred_fallthru
      _
    // Predicated region
    $region34: #{nonselfish_qnetwork.1} parent=1 // pred_check
      _
    $region35: #{nonselfish_qnetwork.1} parent=1 // pred_check_branch
      %645 = sbr.rel (0) target = $region37
    $region36: #{nonselfish_qnetwork.1} parent=1 // pred_region
      _
    $region37: #{nonselfish_qnetwork.1} parent=1 // pred_fallthru
      _
    %646 = vsyncpa [#allocation3], 1
    %647 = vsyncpa [#allocation5], 1

</llo_original>
